<compile_context>
chip_gen: v7x
topology: tpu7x:2x2x1
jax: 0.10.0
libtpu: 0.0.40
codegen_flags: <defaults>
</compile_context>

<pallas_src>
import functools

import jax
import jax.numpy as jnp
from jax.experimental import pallas as pl
from jax.experimental.pallas import tpu as pltpu


def _round_up(a, m):
    return ((a + m - 1) // m) * m


def _vmem_capacity_bytes():
    """Physical VMEM per TensorCore; conservative 64 MiB fallback (v7x)."""
    try:
        info = pltpu.get_tpu_info()
        cap = int(getattr(info, "vmem_capacity_bytes", 0) or 0)
        if cap > 0:
            return cap
    except Exception:
        pass
    return 64 * 1024 * 1024


def _select_tiles(N, H, V, isz, out_isz, tile_n, tile_v, budget):
    """Pick (TN, TV) minimizing modeled HBM traffic under the VMEM budget.

    A single vocab tile (TV = V_pad) makes the weight BlockSpec index constant
    so W is fetched from HBM once; otherwise W is re-streamed once per row
    tile.  TN is capped so there are >= 2 row tiles (v7x megacore) when N
    allows."""
    lane = 128
    V128 = _round_up(V, 128)

    tn_cap = _round_up((N + 1) // 2, 8) if N > 8 else 8
    tn_limit = max(8, min(tn_cap, _round_up(int(tile_n), 8)))
    tn_cands = [c for c in (1024, 512, 256, 128, 64, 32, 16, 8) if c <= tn_limit]
    if tn_limit not in tn_cands:
        tn_cands.insert(0, tn_limit)

    tv_limit = max(128, _round_up(int(tile_v), 128))
    tv_cands = [V128] + [c for c in (4096, 2048, 1024, 512, 256, 128)
                         if c < V128 and c <= tv_limit]

    def usage(tn, tv):
        return (2 * tn * tv * out_isz          # logits out (double-buffered)
                + 2 * tn * H * isz             # x in
                + 2 * H * tv * isz             # w in
                + 2 * 8 * tv * 4               # bias in (sublane-padded)
                + 3 * 2 * tn * lane * 4        # labels/mask in + nll out
                + 3 * tn * lane * 4)           # online-softmax scratch

    def traffic(tn, tv):
        n_pad = _round_up(N, tn)
        v_pad = _round_up(V, tv)
        n_row = n_pad // tn
        n_voc = v_pad // tv
        # Single vocab tile => constant W block index => fetched exactly once.
        w_bytes = H * v_pad * isz * (1 if n_voc == 1 else n_row)
        step_penalty = 400 * 1024              # ~0.35 us/grid-step equivalent
        return (n_pad * H * isz + w_bytes + n_pad * v_pad * out_isz
                + n_row * n_voc * step_penalty)

    best = None
    for tv in tv_cands:
        for tn in tn_cands:
            if usage(tn, tv) > budget:
                continue
            score = (traffic(tn, tv), -tn)     # tie-break: larger row tile
            if best is None or score < best[1]:
                best = ((tn, tv), score)
    if best is None:                            # pathological shapes: minimal tiles
        return 8, 128
    return best[0]


def _classifier_ce_kernel(x_ref, w_ref, b_ref, labels_ref, mask_ref,
                          logits_ref, nll_ref,
                          m_sc, l_sc, lab_sc):
    # x_ref:      (TN, H)  compute dtype (bf16 by default)
    # w_ref:      (H, TV)  compute dtype
    # b_ref:      (1, TV)  f32
    # labels_ref: (TN, 1)  i32
    # mask_ref:   (TN, 1)  i32
    # logits_ref: (TN, TV) output tile (f32 by default)
    # nll_ref:    (TN, 1)  f32  per-row masked NLL (written at last V tile)
    # m_sc/l_sc/lab_sc: (TN, 1) f32 VMEM scratch (online softmax state)
    j = pl.program_id(1)

    @pl.when(j == 0)
    def _init():
        m_sc[...] = jnp.full(m_sc.shape, -jnp.inf, dtype=jnp.float32)
        l_sc[...] = jnp.zeros(l_sc.shape, dtype=jnp.float32)
        lab_sc[...] = jnp.zeros(lab_sc.shape, dtype=jnp.float32)

    # Hot path 1: classifier matmul on the MXU (bf16 operands, f32 accumulate).
    logits_f32 = jnp.dot(x_ref[...], w_ref[...],
                         preferred_element_type=jnp.float32) + b_ref[...]
    logits_ref[...] = logits_f32.astype(logits_ref.dtype)

    # Re-read the just-written tile so the output VMEM buffer doubles as the
    # temp for the CE passes (lossless when the output dtype is f32).
    if logits_ref.dtype == jnp.float32:
        logits = logits_ref[...]
    else:
        logits = logits_f32

    # Hot path 2: online-softmax cross-entropy over the V tiles.
    tn, tv = logits.shape
    local_lab = labels_ref[...] - j * tv                          # (TN, 1) i32
    col = jax.lax.broadcasted_iota(jnp.int32, (tn, tv), 1)        # j-invariant

    m_prev = m_sc[...]
    m_new = jnp.maximum(m_prev, jnp.max(logits, axis=-1, keepdims=True))
    alpha = jnp.exp(m_prev - m_new)
    p_sum = jnp.sum(jnp.exp(logits - m_new), axis=-1, keepdims=True)
    l_sc[...] = alpha * l_sc[...] + p_sum
    # Label gather fused into the same tile sweep (the label lives in exactly
    # one V tile; padded columns never match a real label).
    lab_sc[...] = lab_sc[...] + jnp.sum(
        jnp.where(col == local_lab, logits, 0.0), axis=-1, keepdims=True)
    m_sc[...] = m_new

    @pl.when(j == pl.num_programs(1) - 1)
    def _finalize():
        active = (mask_ref[...] == 1).astype(jnp.float32)          # (TN, 1)
        lse = m_sc[...] + jnp.log(l_sc[...])
        nll_ref[...] = (lse - lab_sc[...]) * active


@functools.partial(jax.jit,
                   static_argnames=("tile_n", "tile_v", "compute_dtype",
                                    "logits_dtype", "force_tiles"))
def inversion_transformer_forward(x, attention_mask, labels, w_cls, b_cls,
                                  *, tile_n=1024, tile_v=2048,
                                  compute_dtype=jnp.bfloat16,
                                  logits_dtype=jnp.float32,
                                  force_tiles=None):
    """x: (B, L, H); attention_mask/labels: (B, L); w_cls: (H, V); b_cls: (V,).

    Returns (logits (B, L, V) in `logits_dtype`, loss scalar f32)."""
    B, L, H = x.shape
    V = w_cls.shape[1]
    N = B * L

    isz = jnp.dtype(compute_dtype).itemsize
    out_isz = jnp.dtype(logits_dtype).itemsize

    # --- Generation-gated VMEM budget (v7x 64 MiB, v5e/v6e 128 MiB). ---
    cap = _vmem_capacity_bytes()
    tile_budget = int(cap * 0.68)       # footprint budget for our buffers
    vmem_limit = int(cap * 0.75)        # scoped limit handed to Mosaic

    if force_tiles is not None:
        TN = _round_up(max(int(force_tiles[0]), 8), 8)
        TV = _round_up(max(int(force_tiles[1]), 128), 128)
    else:
        TN, TV = _select_tiles(N, H, V, isz, out_isz, tile_n, tile_v,
                               tile_budget)

    N_pad = _round_up(N, TN)
    V_pad = _round_up(V, TV)
    n_row_tiles = N_pad // TN
    n_vocab_tiles = V_pad // TV

    # --- Wrapper-side padding & casting (MXU gets bf16 operands). ---
    neg_big = jnp.float32(-1e30)  # padded vocab columns vanish from softmax
    x2 = jnp.pad(x.reshape(N, H), ((0, N_pad - N), (0, 0))).astype(compute_dtype)
    w2 = jnp.pad(w_cls, ((0, 0), (0, V_pad - V))).astype(compute_dtype)
    b2 = jnp.pad(b_cls.astype(jnp.float32), (0, V_pad - V),
                 constant_values=neg_big).reshape(1, V_pad)
    labels2 = jnp.pad(labels.reshape(N).astype(jnp.int32),
                      (0, N_pad - N)).reshape(N_pad, 1)
    mask2 = jnp.pad(attention_mask.reshape(N).astype(jnp.int32),
                    (0, N_pad - N)).reshape(N_pad, 1)  # padded rows: mask = 0

    # --- Cost hint (weights fetched once when there is a single vocab tile). ---
    w_stream = H * V_pad * isz * (1 if n_vocab_tiles == 1 else n_row_tiles)
    cost = pl.CostEstimate(
        flops=2 * N_pad * H * V_pad,
        transcendentals=N_pad * V_pad,
        bytes_accessed=int(N_pad * H * isz + w_stream + N_pad * V_pad * out_isz
                           + n_row_tiles * V_pad * 4 + 3 * N_pad * 4))

    grid_spec = pltpu.PrefetchScalarGridSpec(
        num_scalar_prefetch=0,
        grid=(n_row_tiles, n_vocab_tiles),
        in_specs=[
            pl.BlockSpec((TN, H), lambda i, j: (i, 0)),    # x row tile
            pl.BlockSpec((H, TV), lambda i, j: (0, j)),    # weight slab
            pl.BlockSpec((1, TV), lambda i, j: (0, j)),    # bias slab
            pl.BlockSpec((TN, 1), lambda i, j: (i, 0)),    # labels
            pl.BlockSpec((TN, 1), lambda i, j: (i, 0)),    # mask
        ],
        out_specs=(
            pl.BlockSpec((TN, TV), lambda i, j: (i, j)),   # logits (lane-dense)
            pl.BlockSpec((TN, 1), lambda i, j: (i, 0)),    # per-row masked NLL
        ),
        scratch_shapes=[
            pltpu.VMEM((TN, 1), jnp.float32),   # running max
            pltpu.VMEM((TN, 1), jnp.float32),   # running sum-exp
            pltpu.VMEM((TN, 1), jnp.float32),   # running label logit
        ],
    )

    logits_pad, nll_pad = pl.pallas_call(
        _classifier_ce_kernel,
        out_shape=(
            jax.ShapeDtypeStruct((N_pad, V_pad), logits_dtype),
            jax.ShapeDtypeStruct((N_pad, 1), jnp.float32),
        ),
        grid_spec=grid_spec,
        compiler_params=pltpu.CompilerParams(
            # V axis must stay "arbitrary" (sequential) — it carries the
            # online-softmax state and the resident nll output block.
            dimension_semantics=("parallel", "arbitrary"),
            vmem_limit_bytes=vmem_limit),
        cost_estimate=cost,
    )(x2, w2, b2, labels2, mask2)

    logits = logits_pad[:N, :V].reshape(B, L, V)
    total = jnp.sum(nll_pad[:N, 0])
    count = jnp.sum((attention_mask.reshape(-1) == 1).astype(jnp.float32))
    loss = total / jnp.maximum(count, 1.0)  # guard: no active tokens
    return logits, loss


def _reference_forward(x, attention_mask, labels, w_cls, b_cls,
                       compute_dtype=jnp.bfloat16):
    """Pure-JAX reference of the effective PyTorch forward, with the same
    operand-precision choice as the kernel (bf16 operands, f32 accumulate)."""
    V = w_cls.shape[1]
    xc = x.astype(compute_dtype).astype(jnp.float32)
    wc = w_cls.astype(compute_dtype).astype(jnp.float32)
    logits = jnp.einsum("blh,hv->blv", xc, wc,
                        preferred_element_type=jnp.float32) + b_cls
    flat_logits = logits.reshape(-1, V)
    flat_labels = labels.reshape(-1)
    active = attention_mask.reshape(-1) == 1
    lse = jax.scipy.special.logsumexp(flat_logits, axis=-1)
    label_logit = jnp.take_along_axis(flat_logits, flat_labels[:, None],
                                      axis=-1)[:, 0]
    nll = lse - label_logit
    loss = jnp.sum(jnp.where(active, nll, 0.0)) / jnp.maximum(
        jnp.sum(active.astype(jnp.float32)), 1.0)
    return logits, loss


if __name__ == "__main__":
    def _check(B, L, H, V, **kw):
        key = jax.random.PRNGKey(0)
        k_x, k_w, k_b, k_lab, k_mask = jax.random.split(key, 5)
        x = jax.random.normal(k_x, (B, L, H), dtype=jnp.float32)
        w_cls = jax.random.normal(k_w, (H, V), dtype=jnp.float32) * 0.02
        b_cls = jax.random.normal(k_b, (V,), dtype=jnp.float32) * 0.02
        labels = jax.random.randint(k_lab, (B, L), 0, V, dtype=jnp.int32)
        attention_mask = (jax.random.uniform(k_mask, (B, L)) < 0.75).astype(jnp.int32)
        attention_mask = attention_mask.at[:, 0].set(1)  # >=1 active token

        logits, loss = inversion_transformer_forward(
            x, attention_mask, labels, w_cls, b_cls, **kw)
        jax.block_until_ready((logits, loss))

        ref_logits, ref_loss = _reference_forward(x, attention_mask, labels,
                                                  w_cls, b_cls)
        assert logits.shape == (B, L, V)
        assert bool(jnp.isfinite(loss)), "loss is not finite"
        assert jnp.allclose(logits, ref_logits, atol=1e-4, rtol=1e-4), (
            "logits mismatch: max abs err = "
            f"{float(jnp.max(jnp.abs(logits - ref_logits)))}")
        assert jnp.allclose(loss, ref_loss, atol=1e-4, rtol=1e-4), (
            f"loss mismatch: {float(loss)} vs {float(ref_loss)}")

    # Small config consistent with the module (hidden_size divisible by nhead=8).
    # Auto tile selection: single vocab tile, two row tiles (megacore-friendly).
    _check(2, 8, 32, 128)
    # Exercise the multi-vocab-tile online-softmax path + vocab padding
    # (V=300 -> 3 vocab tiles of 128, 84 padded columns, 2 row tiles).
    _check(2, 8, 32, 300, force_tiles=(8, 128))

    print("KERNEL_OK")
</pallas_src>

<mosaic_0001>
module attributes {stable_mosaic.version = 11 : i64} {
  func.func @_classifier_ce_kernel(%arg0: i32, %arg1: i32, %arg2: memref<8x32xbf16, #tpu.memory_space<vmem>>, %arg3: memref<32x128xbf16, #tpu.memory_space<vmem>>, %arg4: memref<1x128xf32, #tpu.memory_space<vmem>>, %arg5: memref<8x1xi32, #tpu.memory_space<vmem>>, %arg6: memref<8x1xi32, #tpu.memory_space<vmem>>, %arg7: memref<8x128xf32, #tpu.memory_space<vmem>>, %arg8: memref<8x1xf32, #tpu.memory_space<vmem>>, %arg9: memref<8x1xf32, #tpu.memory_space<vmem>>, %arg10: memref<8x1xf32, #tpu.memory_space<vmem>>, %arg11: memref<8x1xf32, #tpu.memory_space<vmem>>) attributes {dimension_semantics = [#tpu.dimension_semantics<parallel>, #tpu.dimension_semantics<arbitrary>], iteration_bounds = array<i64: 2, 1>, scalar_prefetch = 0 : i64, scratch_operands = 3 : i64, tpu.core_type = #tpu.core_type<tc>, window_params = [{transform_indices = @transform_0, window_bounds = array<i64: 8, 32>}, {transform_indices = @transform_1, window_bounds = array<i64: 32, 128>}, {transform_indices = @transform_2, window_bounds = array<i64: 1, 128>}, {transform_indices = @transform_3, window_bounds = array<i64: 8, 1>}, {transform_indices = @transform_4, window_bounds = array<i64: 8, 1>}, {transform_indices = @transform_5, window_bounds = array<i64: 8, 128>}, {transform_indices = @transform_6, window_bounds = array<i64: 8, 1>}]} {
    %c0_i32 = arith.constant 0 : i32
    %0 = arith.cmpi eq, %arg1, %c0_i32 : i32
    %1 = arith.extui %0 : i1 to i32
    %c0_i32_0 = arith.constant 0 : i32
    %2 = arith.cmpi ne, %1, %c0_i32_0 : i32
    scf.if %2 {
      %cst_30 = arith.constant 0xFF800000 : f32
      %44 = vector.broadcast %cst_30 : f32 to vector<8x1xf32>
      %c0_31 = arith.constant 0 : index
      %c0_32 = arith.constant 0 : index
      %45 = vector.load %arg9[%c0_31, %c0_32] : memref<8x1xf32, #tpu.memory_space<vmem>>, vector<8x1xf32>
      tpu.vector_store %arg9[%c0_31, %c0_32], %44 {strides = array<i32>} : memref<8x1xf32, #tpu.memory_space<vmem>>, vector<8x1xf32>,
      %cst_33 = arith.constant 0.000000e+00 : f32
      %46 = vector.broadcast %cst_33 : f32 to vector<8x1xf32>
      %c0_34 = arith.constant 0 : index
      %c0_35 = arith.constant 0 : index
      %47 = vector.load %arg10[%c0_34, %c0_35] : memref<8x1xf32, #tpu.memory_space<vmem>>, vector<8x1xf32>
      tpu.vector_store %arg10[%c0_34, %c0_35], %46 {strides = array<i32>} : memref<8x1xf32, #tpu.memory_space<vmem>>, vector<8x1xf32>,
      %cst_36 = arith.constant 0.000000e+00 : f32
      %48 = vector.broadcast %cst_36 : f32 to vector<8x1xf32>
      %c0_37 = arith.constant 0 : index
      %c0_38 = arith.constant 0 : index
      %49 = vector.load %arg11[%c0_37, %c0_38] : memref<8x1xf32, #tpu.memory_space<vmem>>, vector<8x1xf32>
      tpu.vector_store %arg11[%c0_37, %c0_38], %48 {strides = array<i32>} : memref<8x1xf32, #tpu.memory_space<vmem>>, vector<8x1xf32>,
    } else {
    }
    %c0 = arith.constant 0 : index
    %c0_1 = arith.constant 0 : index
    %3 = vector.load %arg2[%c0, %c0_1] : memref<8x32xbf16, #tpu.memory_space<vmem>>, vector<8x32xbf16>
    %c0_2 = arith.constant 0 : index
    %c0_3 = arith.constant 0 : index
    %4 = vector.load %arg3[%c0_2, %c0_3] : memref<32x128xbf16, #tpu.memory_space<vmem>>, vector<32x128xbf16>
    %cst = arith.constant dense<0.000000e+00> : vector<8x128xf32>
    %5 = tpu.matmul %3, %4, %cst {dimension_numbers = #tpu.dot_dimension_numbers<[1], [0], [0], [1], [0, 0, 1, 1], [], []>} : vector<8x32xbf16>, vector<32x128xbf16>, vector<8x128xf32> -> vector<8x128xf32>
    %c0_4 = arith.constant 0 : index
    %c0_5 = arith.constant 0 : index
    %6 = vector.load %arg4[%c0_4, %c0_5] : memref<1x128xf32, #tpu.memory_space<vmem>>, vector<1x128xf32>
    %7 = vector.broadcast %6 : vector<1x128xf32> to vector<8x128xf32>
    %8 = arith.addf %5, %7 : vector<8x128xf32>
    %c0_6 = arith.constant 0 : index
    %c0_7 = arith.constant 0 : index
    %9 = vector.load %arg7[%c0_6, %c0_7] : memref<8x128xf32, #tpu.memory_space<vmem>>, vector<8x128xf32>
    tpu.vector_store %arg7[%c0_6, %c0_7], %8 {strides = array<i32>} : memref<8x128xf32, #tpu.memory_space<vmem>>, vector<8x128xf32>,
    %c0_8 = arith.constant 0 : index
    %c0_9 = arith.constant 0 : index
    %10 = vector.load %arg7[%c0_8, %c0_9] : memref<8x128xf32, #tpu.memory_space<vmem>>, vector<8x128xf32>
    %c0_10 = arith.constant 0 : index
    %c0_11 = arith.constant 0 : index
    %11 = vector.load %arg5[%c0_10, %c0_11] : memref<8x1xi32, #tpu.memory_space<vmem>>, vector<8x1xi32>
    %c128_i32 = arith.constant 128 : i32
    %12 = arith.muli %arg1, %c128_i32 : i32
    %13 = vector.broadcast %12 : i32 to vector<8x1xi32>
    %14 = arith.subi %11, %13 : vector<8x1xi32>
    %15 = tpu.iota {dimensions = array<i32: 1>} : vector<8x128xi32>
    %c0_12 = arith.constant 0 : index
    %c0_13 = arith.constant 0 : index
    %16 = vector.load %arg9[%c0_12, %c0_13] : memref<8x1xf32, #tpu.memory_space<vmem>>, vector<8x1xf32>
    %cst_14 = arith.constant dense<0xFF800000> : vector<8xf32>
    %17 = vector.multi_reduction <maximumf>, %10, %cst_14 [1] : vector<8x128xf32> to vector<8xf32>
    %18 = vector.shape_cast %17 : vector<8xf32> to vector<8x1xf32>
    %19 = arith.maximumf %16, %18 : vector<8x1xf32>
    %20 = arith.subf %16, %19 : vector<8x1xf32>
    %21 = math.exp %20 : vector<8x1xf32>
    %22 = vector.broadcast %19 : vector<8x1xf32> to vector<8x128xf32>
    %23 = arith.subf %10, %22 : vector<8x128xf32>
    %24 = math.exp %23 : vector<8x128xf32>
    %cst_15 = arith.constant dense<0.000000e+00> : vector<8xf32>
    %25 = vector.multi_reduction <add>, %24, %cst_15 [1] : vector<8x128xf32> to vector<8xf32>
    %26 = vector.shape_cast %25 : vector<8xf32> to vector<8x1xf32>
    %c0_16 = arith.constant 0 : index
    %c0_17 = arith.constant 0 : index
    %27 = vector.load %arg10[%c0_16, %c0_17] : memref<8x1xf32, #tpu.memory_space<vmem>>, vector<8x1xf32>
    %28 = arith.mulf %21, %27 : vector<8x1xf32>
    %29 = arith.addf %28, %26 : vector<8x1xf32>
    %c0_18 = arith.constant 0 : index
    %c0_19 = arith.constant 0 : index
    %30 = vector.load %arg10[%c0_18, %c0_19] : memref<8x1xf32, #tpu.memory_space<vmem>>, vector<8x1xf32>
    tpu.vector_store %arg10[%c0_18, %c0_19], %29 {strides = array<i32>} : memref<8x1xf32, #tpu.memory_space<vmem>>, vector<8x1xf32>,
    %c0_20 = arith.constant 0 : index
    %c0_21 = arith.constant 0 : index
    %31 = vector.load %arg11[%c0_20, %c0_21] : memref<8x1xf32, #tpu.memory_space<vmem>>, vector<8x1xf32>
    %32 = vector.broadcast %14 : vector<8x1xi32> to vector<8x128xi32>
    %33 = arith.cmpi eq, %15, %32 : vector<8x128xi32>
    %cst_22 = arith.constant 0.000000e+00 : f32
    %34 = vector.broadcast %cst_22 : f32 to vector<8x128xf32>
    %35 = arith.select %33, %10, %34 : vector<8x128xi1>, vector<8x128xf32>
    %cst_23 = arith.constant dense<0.000000e+00> : vector<8xf32>
    %36 = vector.multi_reduction <add>, %35, %cst_23 [1] : vector<8x128xf32> to vector<8xf32>
    %37 = vector.shape_cast %36 : vector<8xf32> to vector<8x1xf32>
    %38 = arith.addf %31, %37 : vector<8x1xf32>
    %c0_24 = arith.constant 0 : index
    %c0_25 = arith.constant 0 : index
    %39 = vector.load %arg11[%c0_24, %c0_25] : memref<8x1xf32, #tpu.memory_space<vmem>>, vector<8x1xf32>
    tpu.vector_store %arg11[%c0_24, %c0_25], %38 {strides = array<i32>} : memref<8x1xf32, #tpu.memory_space<vmem>>, vector<8x1xf32>,
    %c0_26 = arith.constant 0 : index
    %c0_27 = arith.constant 0 : index
    %40 = vector.load %arg9[%c0_26, %c0_27] : memref<8x1xf32, #tpu.memory_space<vmem>>, vector<8x1xf32>
    tpu.vector_store %arg9[%c0_26, %c0_27], %19 {strides = array<i32>} : memref<8x1xf32, #tpu.memory_space<vmem>>, vector<8x1xf32>,
    %c0_i32_28 = arith.constant 0 : i32
    %41 = arith.cmpi eq, %arg1, %c0_i32_28 : i32
    %42 = arith.extui %41 : i1 to i32
    %c0_i32_29 = arith.constant 0 : i32
    %43 = arith.cmpi ne, %42, %c0_i32_29 : i32
    scf.if %43 {
      %c0_30 = arith.constant 0 : index
      %c0_31 = arith.constant 0 : index
      %44 = vector.load %arg6[%c0_30, %c0_31] : memref<8x1xi32, #tpu.memory_space<vmem>>, vector<8x1xi32>
      %c1_i32 = arith.constant 1 : i32
      %45 = vector.broadcast %c1_i32 : i32 to vector<8x1xi32>
      %46 = arith.cmpi eq, %44, %45 : vector<8x1xi32>
      %47 = arith.extui %46 : vector<8x1xi1> to vector<8x1xi32>
      %48 = arith.sitofp %47 : vector<8x1xi32> to vector<8x1xf32>
      %c0_32 = arith.constant 0 : index
      %c0_33 = arith.constant 0 : index
      %49 = vector.load %arg9[%c0_32, %c0_33] : memref<8x1xf32, #tpu.memory_space<vmem>>, vector<8x1xf32>
      %c0_34 = arith.constant 0 : index
      %c0_35 = arith.constant 0 : index
      %50 = vector.load %arg10[%c0_34, %c0_35] : memref<8x1xf32, #tpu.memory_space<vmem>>, vector<8x1xf32>
      %51 = math.log %50 : vector<8x1xf32>
      %52 = arith.addf %49, %51 : vector<8x1xf32>
      %c0_36 = arith.constant 0 : index
      %c0_37 = arith.constant 0 : index
      %53 = vector.load %arg11[%c0_36, %c0_37] : memref<8x1xf32, #tpu.memory_space<vmem>>, vector<8x1xf32>
      %54 = arith.subf %52, %53 : vector<8x1xf32>
      %55 = arith.mulf %54, %48 : vector<8x1xf32>
      %c0_38 = arith.constant 0 : index
      %c0_39 = arith.constant 0 : index
      %56 = vector.load %arg8[%c0_38, %c0_39] : memref<8x1xf32, #tpu.memory_space<vmem>>, vector<8x1xf32>
      tpu.vector_store %arg8[%c0_38, %c0_39], %55 {strides = array<i32>} : memref<8x1xf32, #tpu.memory_space<vmem>>, vector<8x1xf32>,
    } else {
    }
    return
  }
  func.func @transform_0(%arg0: i32, %arg1: i32) -> (i32, i32) {
    %c0_i32 = arith.constant 0 : i32
    %c0_i32_0 = arith.constant 0 : i32
    return %arg0, %c0_i32 : i32, i32
  }
  func.func @transform_1(%arg0: i32, %arg1: i32) -> (i32, i32) {
    %c0_i32 = arith.constant 0 : i32
    %c0_i32_0 = arith.constant 0 : i32
    return %c0_i32, %arg1 : i32, i32
  }
  func.func @transform_2(%arg0: i32, %arg1: i32) -> (i32, i32) {
    %c0_i32 = arith.constant 0 : i32
    %c0_i32_0 = arith.constant 0 : i32
    return %c0_i32, %arg1 : i32, i32
  }
  func.func @transform_3(%arg0: i32, %arg1: i32) -> (i32, i32) {
    %c0_i32 = arith.constant 0 : i32
    %c0_i32_0 = arith.constant 0 : i32
    return %arg0, %c0_i32 : i32, i32
  }
  func.func @transform_4(%arg0: i32, %arg1: i32) -> (i32, i32) {
    %c0_i32 = arith.constant 0 : i32
    %c0_i32_0 = arith.constant 0 : i32
    return %arg0, %c0_i32 : i32, i32
  }
  func.func @transform_5(%arg0: i32, %arg1: i32) -> (i32, i32) {
    %c0_i32 = arith.constant 0 : i32
    return %arg0, %arg1 : i32, i32
  }
  func.func @transform_6(%arg0: i32, %arg1: i32) -> (i32, i32) {
    %c0_i32 = arith.constant 0 : i32
    %c0_i32_0 = arith.constant 0 : i32
    return %arg0, %c0_i32 : i32, i32
  }
}

</mosaic_0001>

<llo_original>
// kernel: inversion_transformer_forward.1
$region0: #{inversion_transformer_forward.1}
  #allocation0 [shape = 'u32[]', space=smem, size = 0x4, offset = 0x4, fixed_abs, tag = 'smem constant byte address 0x4 - core index']
  #allocation1 [shape = 'u32[144,128]{1,0:T(1,128)}', space=vmem, size = 0x12000, scoped, tag = 'internal scratch']
  #allocation2 [shape = 'f32[8,1]{1,0:T(8,128)}', space=vmem, size = 0x1000, scoped, tag = 'scratch operand']
  #allocation3 [shape = 'f32[8,1]{1,0:T(8,128)}', space=vmem, size = 0x1000, scoped, tag = 'scratch operand']
  #allocation4 [shape = 'f32[8,1]{1,0:T(8,128)}', space=vmem, size = 0x1000, scoped, tag = 'scratch operand']
  %s0 = inlined_call_operand.vmem [shape: bf16[16,32], index: 0, kind: input, shape index: {}]
  %s1 = inlined_call_operand.vmem [shape: bf16[32,128], index: 1, kind: input, shape index: {}]
  %s2 = inlined_call_operand.vmem [shape: f32[1,128], index: 2, kind: input, shape index: {}]
  %s3 = inlined_call_operand.vmem [shape: s32[16,1], index: 3, kind: input, shape index: {}]
  %s4 = inlined_call_operand.vmem [shape: s32[16,1], index: 4, kind: input, shape index: {}]
  %s5 = inlined_call_operand.hbm [shape: f32[16,128], index: 5, kind: output, shape index: {0}]
  %s6 = inlined_call_operand.vmem [shape: f32[16,1], index: 6, kind: output, shape index: {1}]
  %7 = xla_tuple %s5, %s6
  %s8 = sld [smem:[#allocation0]]
  $region69: #{inversion_transformer_forward.1} parent=0
    _
  %s10 = ssub.s32 1, %s8
  %s11 = scalar_select 0, %s10, %s8
  $region1: #{inversion_transformer_forward.1} parent=0
    #allocation5 [shape = 'u8[8192]{0}', space=vmem, size = 0x2000, scoped, tag = 'output window, operand 0']
    #allocation6 [shape = 's32[2]{0}', space=sflag, size = 0x8, scoped, tag = 'scoped memory for inversion_transformer_forward.1']
    %12 = vsyncpa [#allocation6], 0
    %s13 = scalar_lea.sflag [#allocation6], 1
    %14 = vsyncpa %s13, 0
    loop: start=0, step=1, limit=4
    $region2: #{inversion_transformer_forward.1} parent=1 // loop_pre_header
      _
    $region3: #{inversion_transformer_forward.1} parent=1 // loop_header
      %s16 = sphi 0, %s20
      %p17 = scmp.ge.s32.totalorder %s16, 4
      %s23 = sphi 0, %s35
      %s24 = sphi 0, %s31
      %s25 = sphi 0, %s23
      %s26 = sphi 0, %s24
      %s27 = sphi 0, %s25
      %s28 = sphi 0, %s26
      %s38 = sphi 0, %s40
      %s41 = sphi 0, %s38
      %s42 = sphi 0, %s41
      %s58 = sphi 0, %s42
      %s64 = sphi 0, %s66
      %s67 = sphi 0, %s64
      %s68 = sphi 0, %s67
      %s84 = sphi 0, %s68
      %s90 = sphi 0, %s92
      %s93 = sphi 0, %s90
      %s94 = sphi 0, %s93
      %s110 = sphi 0, %s94
      %s116 = sphi 0, %s118
      %s119 = sphi 0, %s116
      %s120 = sphi 0, %s119
      %s136 = sphi 0, %s120
      %s142 = sphi 0, %s144
      %s145 = sphi 0, %s142
      %s146 = sphi 0, %s145
      %s162 = sphi 0, %s146
      %s170 = sphi 0, %s172
      %s173 = sphi 0, %s170
      %s174 = sphi 0, %s173
      %s190 = sphi 0, %s174
      %s196 = sphi 0, %s198
      %s199 = sphi 0, %s196
      %s200 = sphi 0, %s199
      %s216 = sphi 0, %s200
    $region4: #{inversion_transformer_forward.1} parent=1 // loop_header_branch
      %19 = sbr.rel (%p17) target = $region8
    $region5: #{inversion_transformer_forward.1} parent=1 // loop_body
      %s21 = ssub.s32 %s16, 1
      %s22 = ssub.s32 %s16, 2
      %s29 = sadd.s32 1, %s24
      %p30 = scmp.ge.s32.totalorder %s29, 1
      %s31 = scalar_select %p30, 0, %s29
      %s32 = sadd.s32 1, %s23
      %s33 = scalar_select %p30, %s32, %s23
      %p34 = scmp.ge.s32.totalorder %s33, 2
      %s35 = scalar_select %p34, 0, %s33
      %s36 = ssub.s32 %s23, %s35
      %p37 = scmp.eq.s32.totalorder %s36, 0
      %s39 = sadd.s32 %s38, 1
      %s40 = scalar_select %p37, %s38, %s39
      %p43 = pneg %p37
      %p44 = scmp.eq.s32.totalorder %s16, 1
      %p45 = por %p43, %p44
      %p46 = scmp.ne.s32.totalorder %s38, %s41
      %p47 = scmp.eq.s32.totalorder %s16, 0
      %p48 = por %p46, %p47
      %p49 = scmp.ne.s32.totalorder %s38, %s41
      %p50 = scmp.eq.s32.totalorder %s21, 1
      %p51 = por %p49, %p50
      %p52 = scmp.ne.s32.totalorder %s41, %s42
      %p53 = scmp.eq.s32.totalorder %s21, 0
      %p54 = por %p52, %p53
      %p55 = scmp.ne.s32.totalorder %s41, %s42
      %p56 = scmp.eq.s32.totalorder %s22, 1
      %p57 = por %p55, %p56
      %p59 = scmp.ne.s32.totalorder %s42, %s58
      %p60 = scmp.eq.s32.totalorder %s22, 0
      %p61 = por %p59, %p60
      %s62 = ssub.s32 %s24, %s31
      %p63 = scmp.eq.s32.totalorder %s62, 0
      %s65 = sadd.s32 %s64, 1
      %s66 = scalar_select %p63, %s64, %s65
      %p69 = pneg %p63
      %p70 = scmp.eq.s32.totalorder %s16, 1
      %p71 = por %p69, %p70
      %p72 = scmp.ne.s32.totalorder %s64, %s67
      %p73 = scmp.eq.s32.totalorder %s16, 0
      %p74 = por %p72, %p73
      %p75 = scmp.ne.s32.totalorder %s64, %s67
      %p76 = scmp.eq.s32.totalorder %s21, 1
      %p77 = por %p75, %p76
      %p78 = scmp.ne.s32.totalorder %s67, %s68
      %p79 = scmp.eq.s32.totalorder %s21, 0
      %p80 = por %p78, %p79
      %p81 = scmp.ne.s32.totalorder %s67, %s68
      %p82 = scmp.eq.s32.totalorder %s22, 1
      %p83 = por %p81, %p82
      %p85 = scmp.ne.s32.totalorder %s68, %s84
      %p86 = scmp.eq.s32.totalorder %s22, 0
      %p87 = por %p85, %p86
      %s88 = ssub.s32 %s24, %s31
      %p89 = scmp.eq.s32.totalorder %s88, 0
      %s91 = sadd.s32 %s90, 1
      %s92 = scalar_select %p89, %s90, %s91
      %p95 = pneg %p89
      %p96 = scmp.eq.s32.totalorder %s16, 1
      %p97 = por %p95, %p96
      %p98 = scmp.ne.s32.totalorder %s90, %s93
      %p99 = scmp.eq.s32.totalorder %s16, 0
      %p100 = por %p98, %p99
      %p101 = scmp.ne.s32.totalorder %s90, %s93
      %p102 = scmp.eq.s32.totalorder %s21, 1
      %p103 = por %p101, %p102
      %p104 = scmp.ne.s32.totalorder %s93, %s94
      %p105 = scmp.eq.s32.totalorder %s21, 0
      %p106 = por %p104, %p105
      %p107 = scmp.ne.s32.totalorder %s93, %s94
      %p108 = scmp.eq.s32.totalorder %s22, 1
      %p109 = por %p107, %p108
      %p111 = scmp.ne.s32.totalorder %s94, %s110
      %p112 = scmp.eq.s32.totalorder %s22, 0
      %p113 = por %p111, %p112
      %s114 = ssub.s32 %s23, %s35
      %p115 = scmp.eq.s32.totalorder %s114, 0
      %s117 = sadd.s32 %s116, 1
      %s118 = scalar_select %p115, %s116, %s117
      %p121 = pneg %p115
      %p122 = scmp.eq.s32.totalorder %s16, 1
      %p123 = por %p121, %p122
      %p124 = scmp.ne.s32.totalorder %s116, %s119
      %p125 = scmp.eq.s32.totalorder %s16, 0
      %p126 = por %p124, %p125
      %p127 = scmp.ne.s32.totalorder %s116, %s119
      %p128 = scmp.eq.s32.totalorder %s21, 1
      %p129 = por %p127, %p128
      %p130 = scmp.ne.s32.totalorder %s119, %s120
      %p131 = scmp.eq.s32.totalorder %s21, 0
      %p132 = por %p130, %p131
      %p133 = scmp.ne.s32.totalorder %s119, %s120
      %p134 = scmp.eq.s32.totalorder %s22, 1
      %p135 = por %p133, %p134
      %p137 = scmp.ne.s32.totalorder %s120, %s136
      %p138 = scmp.eq.s32.totalorder %s22, 0
      %p139 = por %p137, %p138
      %s140 = ssub.s32 %s23, %s35
      %p141 = scmp.eq.s32.totalorder %s140, 0
      %s143 = sadd.s32 %s142, 1
      %s144 = scalar_select %p141, %s142, %s143
      %p147 = pneg %p141
      %p148 = scmp.eq.s32.totalorder %s16, 1
      %p149 = por %p147, %p148
      %p150 = scmp.ne.s32.totalorder %s142, %s145
      %p151 = scmp.eq.s32.totalorder %s16, 0
      %p152 = por %p150, %p151
      %p153 = scmp.ne.s32.totalorder %s142, %s145
      %p154 = scmp.eq.s32.totalorder %s21, 1
      %p155 = por %p153, %p154
      %p156 = scmp.ne.s32.totalorder %s145, %s146
      %p157 = scmp.eq.s32.totalorder %s21, 0
      %p158 = por %p156, %p157
      %p159 = scmp.ne.s32.totalorder %s145, %s146
      %p160 = scmp.eq.s32.totalorder %s22, 1
      %p161 = por %p159, %p160
      %p163 = scmp.ne.s32.totalorder %s146, %s162
      %p164 = scmp.eq.s32.totalorder %s22, 0
      %p165 = por %p163, %p164
      %s166 = ssub.s32 %s23, %s35
      %s167 = ssub.s32 %s24, %s31
      %s168 = sor.u32 %s166, %s167
      %p169 = scmp.eq.s32.totalorder %s168, 0
      %s171 = sadd.s32 %s170, 1
      %s172 = scalar_select %p169, %s170, %s171
      %p175 = pneg %p169
      %p176 = scmp.eq.s32.totalorder %s16, 1
      %p177 = por %p175, %p176
      %p178 = scmp.ne.s32.totalorder %s170, %s173
      %p179 = scmp.eq.s32.totalorder %s16, 0
      %p180 = por %p178, %p179
      %p181 = scmp.ne.s32.totalorder %s170, %s173
      %p182 = scmp.eq.s32.totalorder %s21, 1
      %p183 = por %p181, %p182
      %p184 = scmp.ne.s32.totalorder %s173, %s174
      %p185 = scmp.eq.s32.totalorder %s21, 0
      %p186 = por %p184, %p185
      %p187 = scmp.ne.s32.totalorder %s173, %s174
      %p188 = scmp.eq.s32.totalorder %s22, 1
      %p189 = por %p187, %p188
      %p191 = scmp.ne.s32.totalorder %s174, %s190
      %p192 = scmp.eq.s32.totalorder %s22, 0
      %p193 = por %p191, %p192
      %s194 = ssub.s32 %s23, %s35
      %p195 = scmp.eq.s32.totalorder %s194, 0
      %s197 = sadd.s32 %s196, 1
      %s198 = scalar_select %p195, %s196, %s197
      %p201 = pneg %p195
      %p202 = scmp.eq.s32.totalorder %s16, 1
      %p203 = por %p201, %p202
      %p204 = scmp.ne.s32.totalorder %s196, %s199
      %p205 = scmp.eq.s32.totalorder %s16, 0
      %p206 = por %p204, %p205
      %p207 = scmp.ne.s32.totalorder %s196, %s199
      %p208 = scmp.eq.s32.totalorder %s21, 1
      %p209 = por %p207, %p208
      %p210 = scmp.ne.s32.totalorder %s199, %s200
      %p211 = scmp.eq.s32.totalorder %s21, 0
      %p212 = por %p210, %p211
      %p213 = scmp.ne.s32.totalorder %s199, %s200
      %p214 = scmp.eq.s32.totalorder %s22, 1
      %p215 = por %p213, %p214
      %p217 = scmp.ne.s32.totalorder %s200, %s216
      %p218 = scmp.eq.s32.totalorder %s22, 0
      %p219 = por %p217, %p218
      %p220 = scmp.le.s32.totalorder 1, %s16
      %p221 = scmp.lt.s32.totalorder %s16, 3
      %p222 = pnand %p220, %p221
      %p223 = pneg %p222
      // Predicated region
      $region9: #{inversion_transformer_forward.1} parent=5 // pred_check
        _
      $region10: #{inversion_transformer_forward.1} parent=5 // pred_check_branch
        %225 = sbr.rel (%p222) target = $region12
      $region11: #{inversion_transformer_forward.1} parent=5 // pred_region
        %s226 = ssub.s32 %s16, 1
        // Predicated region
        $region13: #{inversion_transformer_forward.1} parent=11 // pred_check
          %p227 = pneg %p80
        $region14: #{inversion_transformer_forward.1} parent=11 // pred_check_branch
          %229 = sbr.rel (%p227) target = $region16
        $region15: #{inversion_transformer_forward.1} parent=11 // pred_region
          %p230 = scmp.lt.s32.totalorder %s26, 0
          %s231 = scalar_select %p230, %s26, 0
          %s232 = smul.addr %s231, 4
          %s233 = scalar_lea.vmem %s1, %s232
        $region16: #{inversion_transformer_forward.1} parent=11 // pred_fallthru
          _
        // Predicated region
        $region17: #{inversion_transformer_forward.1} parent=11 // pred_check
          %p234 = pneg %p106
        $region18: #{inversion_transformer_forward.1} parent=11 // pred_check_branch
          %236 = sbr.rel (%p234) target = $region20
        $region19: #{inversion_transformer_forward.1} parent=11 // pred_region
          %p237 = scmp.lt.s32.totalorder %s26, 0
          %s238 = scalar_select %p237, %s26, 0
          %s239 = scalar_lea.vmem %s2, %s238
        $region20: #{inversion_transformer_forward.1} parent=11 // pred_fallthru
          _
      $region12: #{inversion_transformer_forward.1} parent=5 // pred_fallthru
        _
      %p240 = scmp.lt.s32.totalorder %s16, 2
      // Predicated region
      $region21: #{inversion_transformer_forward.1} parent=5 // pred_check
        %p241 = pneg %p240
      $region22: #{inversion_transformer_forward.1} parent=5 // pred_check_branch
        %243 = sbr.rel (%p241) target = $region24
      $region23: #{inversion_transformer_forward.1} parent=5 // pred_region
        // Predicated region
        $region25: #{inversion_transformer_forward.1} parent=23 // pred_check
          %p244 = pneg %p48
        $region26: #{inversion_transformer_forward.1} parent=23 // pred_check_branch
          %246 = sbr.rel (%p244) target = $region28
        $region27: #{inversion_transformer_forward.1} parent=23 // pred_region
          %p247 = scmp.lt.s32.totalorder %s23, 1
          %s248 = scalar_select %p247, %s23, 1
          %s249 = smul.addr %s248, 4
          %s250 = scalar_lea.vmem %s0, %s249
        $region28: #{inversion_transformer_forward.1} parent=23 // pred_fallthru
          _
        // Predicated region
        $region29: #{inversion_transformer_forward.1} parent=23 // pred_check
          %p251 = pneg %p126
        $region30: #{inversion_transformer_forward.1} parent=23 // pred_check_branch
          %253 = sbr.rel (%p251) target = $region32
        $region31: #{inversion_transformer_forward.1} parent=23 // pred_region
          %p254 = scmp.lt.s32.totalorder %s23, 1
          %s255 = scalar_select %p254, %s23, 1
          %s256 = smul.addr %s255, 8
          %s257 = scalar_lea.vmem %s3, %s256
        $region32: #{inversion_transformer_forward.1} parent=23 // pred_fallthru
          _
        // Predicated region
        $region33: #{inversion_transformer_forward.1} parent=23 // pred_check
          %p258 = pneg %p152
        $region34: #{inversion_transformer_forward.1} parent=23 // pred_check_branch
          %260 = sbr.rel (%p258) target = $region36
        $region35: #{inversion_transformer_forward.1} parent=23 // pred_region
          %p261 = scmp.lt.s32.totalorder %s23, 1
          %s262 = scalar_select %p261, %s23, 1
          %s263 = smul.addr %s262, 8
          %s264 = scalar_lea.vmem %s4, %s263
        $region36: #{inversion_transformer_forward.1} parent=23 // pred_fallthru
          _
      $region24: #{inversion_transformer_forward.1} parent=5 // pred_fallthru
        _
      %p265 = scmp.le.s32.totalorder 1, %s16
      %p266 = scmp.lt.s32.totalorder %s16, 3
      %p267 = pnand %p265, %p266
      %p268 = pneg %p267
      // Predicated region
      $region37: #{inversion_transformer_forward.1} parent=5 // pred_check
        _
      $region38: #{inversion_transformer_forward.1} parent=5 // pred_check_branch
        %270 = sbr.rel (%p267) target = $region40
      $region39: #{inversion_transformer_forward.1} parent=5 // pred_region
        %s271 = ssub.s32 %s16, 1
        %p272 = scmp.lt.s32.totalorder %s25, 1
        %s273 = scalar_select %p272, %s25, 1
        %s274 = smul.addr %s273, 4
        %s275 = scalar_lea.vmem %s0, %s274
        %p276 = pneg %p54
        %p277 = pneg %p51
        %p278 = scmp.lt.s32.totalorder %s26, 0
        %s279 = scalar_select %p278, %s26, 0
        %s280 = smul.addr %s279, 4
        %s281 = scalar_lea.vmem %s1, %s280
        %p282 = pneg %p80
        %p283 = pneg %p77
        %p284 = scmp.lt.s32.totalorder %s26, 0
        %s285 = scalar_select %p284, %s26, 0
        %s286 = scalar_lea.vmem %s2, %s285
        %p287 = pneg %p106
        %p288 = pneg %p103
        %p289 = scmp.lt.s32.totalorder %s25, 1
        %s290 = scalar_select %p289, %s25, 1
        %s291 = smul.addr %s290, 8
        %s292 = scalar_lea.vmem %s3, %s291
        %p293 = pneg %p132
        %p294 = pneg %p129
        %p295 = scmp.lt.s32.totalorder %s25, 1
        %s296 = scalar_select %p295, %s25, 1
        %s297 = smul.addr %s296, 8
        %s298 = scalar_lea.vmem %s4, %s297
        %p299 = pneg %p158
        %p300 = pneg %p155
        %p301 = pneg %p186
        %p302 = pneg %p183
        %s303 = sand.u32 %s173, 1
        %s304 = scalar_lea.sflag [#allocation6], %s303
        %s305 = sand.u32 %s173, 1
        %s306 = smul.addr %s305, 8
        %s307 = scalar_lea.vmem [#allocation5], %s306
        %p308 = pneg %p212
        %p309 = pneg %p209
        %p310 = scmp.lt.s32.totalorder %s25, 1
        %s311 = scalar_select %p310, %s25, 1
        %s312 = smul.addr %s311, 8
        %s313 = scalar_lea.vmem %s6, %s312
        %p314 = scmp.lt.s32.totalorder %s25, 1
        %s315 = scalar_select %p314, %s25, 1
        %s316 = smul.addr %s315, 4
        %s317 = scalar_lea.vmem %s0, %s316
        %p318 = scmp.lt.s32.totalorder %s26, 0
        %s319 = scalar_select %p318, %s26, 0
        %s320 = smul.addr %s319, 4
        %s321 = scalar_lea.vmem %s1, %s320
        %p322 = scmp.lt.s32.totalorder %s26, 0
        %s323 = scalar_select %p322, %s26, 0
        %s324 = scalar_lea.vmem %s2, %s323
        %p325 = scmp.lt.s32.totalorder %s25, 1
        %s326 = scalar_select %p325, %s25, 1
        %s327 = smul.addr %s326, 8
        %s328 = scalar_lea.vmem %s3, %s327
        %p329 = scmp.lt.s32.totalorder %s25, 1
        %s330 = scalar_select %p329, %s25, 1
        %s331 = smul.addr %s330, 8
        %s332 = scalar_lea.vmem %s4, %s331
        %p333 = scmp.lt.s32.totalorder %s25, 1
        %s334 = scalar_select %p333, %s25, 1
        %s335 = smul.addr %s334, 8
        %s336 = scalar_lea.vmem %s6, %s335
        %p338 = scmp.eq.s32.totalorder %s26, 0
        // Predicated region
        $region41: #{inversion_transformer_forward.1} parent=39 // pred_check
          %p339 = pneg %p338
        $region42: #{inversion_transformer_forward.1} parent=39 // pred_check_branch
          %341 = sbr.rel (%p339) target = $region44
        $region43: #{inversion_transformer_forward.1} parent=39 // pred_region
          %vm342 = vcmask 7168
          %343 = vst.msk [vmem:[#allocation2] sm:$0xff] %vm342, -inf
          %344 = vst.msk [vmem:[#allocation3] sm:$0xff] %vm342, 0.0
          %345 = vst.msk [vmem:[#allocation4] sm:$0xff] %vm342, 0.0
        $region44: #{inversion_transformer_forward.1} parent=39 // pred_fallthru
          _
        %v346 = vld [vmem:[%s317] sm:$0xf]
        %v347 = vld [vmem:[%s321] sm:$0xf]
        %v348 = vld [vmem:[%s321 + $0x4] sm:$0xf]
        %v349 = vld [vmem:[%s321 + $0x8] sm:$0xf]
        %v350 = vld [vmem:[%s321 + $0xc] sm:$0xf]
        %v351 = vld [vmem:[%s324] sm:$0x1]
        %v353 = vlaneseq
        %v354 = vshrl.u32 %v353, 7
        %v355 = vsub.s32 0, %v354
        %v356 = vrot.slane %v351, %v355
        %v362 = vunpack.c.l.b16 %v347
        %v363 = vunpack.c.l.b16 %v348
        %v364 = vunpack.c.l.b16 %v349
        %v365 = vunpack.c.l.b16 %v350
        %v366 = vpack.c.b16 %v363, %v362
        %v367 = vpack.c.b16 %v365, %v364
        %vm370 = vcmask 261120
        %v372 = vsel %vm370, %v346, 0
        %374 = vmatprep.subr.bf16.mxu0 0
        %375 = vmatpush1.bf16.msra.mxu0 %v366
        %376 = vmatprep.subr.bf16.mxu0 0
        %377 = vmatpush1.bf16.msra.mxu0 %v367
        %378 = vmatprep.subr.bf16.mxu0 0
        %379 = vmatpush1.bf16.msra.mxu0 0
        %380 = vmatprep.subr.bf16.mxu0 0
        %381 = vmatpush1.bf16.msra.mxu0 0
        %382 = vmatprep.subr.bf16.mxu0 0
        %383 = vmatpush1.bf16.msra.mxu0 0
        %384 = vmatprep.subr.bf16.mxu0 0
        %385 = vmatpush1.bf16.msra.mxu0 0
        %386 = vmatprep.subr.bf16.mxu0 0
        %387 = vmatpush1.bf16.msra.mxu0 0
        %388 = vmatprep.subr.bf16.mxu0 0
        %389 = vmatpush1.bf16.msra.mxu0 0
        %390 = vmatprep.subr.bf16.mxu0 0
        %391 = vmatpush1.bf16.msra.mxu0 0
        %392 = vmatprep.subr.bf16.mxu0 0
        %393 = vmatpush1.bf16.msra.mxu0 0
        %394 = vmatprep.subr.bf16.mxu0 0
        %395 = vmatpush1.bf16.msra.mxu0 0
        %396 = vmatprep.subr.bf16.mxu0 0
        %397 = vmatpush1.bf16.msra.mxu0 0
        %398 = vmatprep.subr.bf16.mxu0 0
        %399 = vmatpush1.bf16.msra.mxu0 0
        %400 = vmatprep.subr.bf16.mxu0 0
        %401 = vmatpush1.bf16.msra.mxu0 0
        %402 = vmatprep.subr.bf16.mxu0 0
        %403 = vmatpush1.bf16.msra.mxu0 0
        %404 = vmatprep.subr.bf16.mxu0 0
        %405 = vmatpush1.bf16.msra.mxu0 0
        %406 = vmatprep.mubr.bf16.mxu0 0
        %407 = vmatmul.mubr.bf16.gmra.mrb[0].mxu0 %v372
        %v408 = vpop.f32.mrb[0].mxu0
        %v409 = vadd.f32 %v356, %v408
        %v410 = vpop.f32.mrb[0].mxu0
        %v411 = vpop.f32.mrb[0].mxu0
        %v412 = vpop.f32.mrb[0].mxu0
        %413 = vdwg.mxu0
        %414 = vst [vmem:[%s307] sm:$0xff] %v409
        %v415 = vld [vmem:[%s307] sm:$0xff]
        %v416 = vld [vmem:[%s328] sm:$0xff]
        %s417 = smul.u32 %s26, 128
        %v418 = vstv %s417
        %v419 = vsub.s32 %v416, %v418
        %v420 = vlaneseq
        %v421 = vand.u32 %v420, 127
        %v422 = vld [vmem:[#allocation2] sm:$0xff]
        %423 = vmax.xlane.f32.xlu0 %v415
        %v424 = vpop.xlane.xlu0 %423
        %v425 = vmax.f32 %v422, %v424
        %v426 = vsub.f32 %v422, %v425
        %v427 = vmul.f32 %v426, 1.442695
        %v428 = vpow.pop %v427
        %430 = vset.pattern.permute.xlu0 0
        %431 = vperm.xlu0 %430, %v425
        %v432 = vpop.permute.xlu0 %431
        %v434 = vsub.f32 %v415, %v432
        %v435 = vmul.f32 %v434, 1.442695
        %v436 = vpow.pop %v435
        %437 = vadd.xlane.f32.xlu0 %v436
        %v438 = vpop.xlane.xlu0 %437
        %v439 = vld [vmem:[#allocation3] sm:$0xff]
        %v440 = vmul.f32 %v428, %v439
        %v441 = vadd.f32 %v440, %v438
        %vm442 = vcmask 7168
        %443 = vst.msk [vmem:[#allocation3] sm:$0xff] %vm442, %v441
        %v444 = vld [vmem:[#allocation4] sm:$0xff]
        %445 = vset.pattern.permute.xlu0 0
        %446 = vperm.xlu0 %445, %v419
        %v447 = vpop.permute.xlu0 %446
        %vm448 = vcmp.eq.s32.totalorder %v421, %v447
        %v449 = vsel %vm448, %v415, 0.0
        %450 = vadd.xlane.f32.xlu0 %v449
        %v451 = vpop.xlane.xlu0 %450
        %v452 = vadd.f32 %v444, %v451
        %453 = vst.msk [vmem:[#allocation4] sm:$0xff] %vm442, %v452
        %454 = vst.msk [vmem:[#allocation2] sm:$0xff] %vm442, %v425
        // Predicated region
        $region45: #{inversion_transformer_forward.1} parent=39 // pred_check
          %p455 = pneg %p338
        $region46: #{inversion_transformer_forward.1} parent=39 // pred_check_branch
          %457 = sbr.rel (%p455) target = $region48
        $region47: #{inversion_transformer_forward.1} parent=39 // pred_region
          %v458 = vld [vmem:[%s332] sm:$0xff]
          %vm459 = vcmp.eq.s32.totalorder %v458, 1
          %v460 = vsel %vm459, 1, 0
          %v461 = vcvt.s32.f32 %v460
          %v462 = vld [vmem:[#allocation2] sm:$0xff]
          %v463 = vld [vmem:[#allocation3] sm:$0xff]
          %v464 = vlog2.pop %v463
          %v465 = vmul.f32 %v464, 0.6931472
          %v466 = vadd.f32 %v462, %v465
          %v467 = vld [vmem:[#allocation4] sm:$0xff]
          %v468 = vsub.f32 %v466, %v467
          %v469 = vmul.f32 %v468, %v461
          %470 = vst.msk [vmem:[%s336] sm:$0xff] %vm442, %v469
        $region48: #{inversion_transformer_forward.1} parent=39 // pred_fallthru
          _
        %s471 = sand.u32 %s173, 1
        %s472 = scalar_lea.sflag [#allocation6], %s471
        %s473 = sand.u32 %s173, 1
        %s474 = smul.addr %s473, 8
        %s475 = scalar_lea.vmem [#allocation5], %s474
        %p476 = scmp.lt.s32.totalorder %s25, 1
        %s477 = scalar_select %p476, %s25, 1
        %s478 = smul.addr %s477, 8
        %s479 = scalar_lea.vmem %s6, %s478
        // Predicated region
        $region49: #{inversion_transformer_forward.1} parent=39 // pred_check
          %p480 = pneg %p183
        $region50: #{inversion_transformer_forward.1} parent=39 // pred_check_branch
          %482 = sbr.rel (%p480) target = $region52
        $region51: #{inversion_transformer_forward.1} parent=39 // pred_region
          %s484 = ssub.s32 128, 128
          %485 = vsyncadd %s472, %s484
          %s486 = sadd.s32 %s26, %s25
          %s487 = smul.addr %s486, 128
          %s488 = scalar_lea.hbm %s5, %s487
          %s490 = sshll.u32 %s475, 4
          %s491 = int_to_ptr.vmem [resolvable:$true] %s490
          %493 = dma.vmem_to_hbm [thread:$0]  %s491, 128, %s488, %s472
        $region52: #{inversion_transformer_forward.1} parent=39 // pred_fallthru
          _
        // Predicated region
        $region53: #{inversion_transformer_forward.1} parent=39 // pred_check
          %p494 = pneg %p209
        $region54: #{inversion_transformer_forward.1} parent=39 // pred_check_branch
          %496 = sbr.rel (%p494) target = $region56
        $region55: #{inversion_transformer_forward.1} parent=39 // pred_region
          _
        $region56: #{inversion_transformer_forward.1} parent=39 // pred_fallthru
          _
      $region40: #{inversion_transformer_forward.1} parent=5 // pred_fallthru
        _
      %p497 = scmp.le.s32.totalorder 2, %s16
      // Predicated region
      $region57: #{inversion_transformer_forward.1} parent=5 // pred_check
        %p498 = pneg %p497
      $region58: #{inversion_transformer_forward.1} parent=5 // pred_check_branch
        %500 = sbr.rel (%p498) target = $region60
      $region59: #{inversion_transformer_forward.1} parent=5 // pred_region
        %s501 = ssub.s32 %s16, 2
        // Predicated region
        $region61: #{inversion_transformer_forward.1} parent=59 // pred_check
          %p502 = pneg %p189
        $region62: #{inversion_transformer_forward.1} parent=59 // pred_check_branch
          %504 = sbr.rel (%p502) target = $region64
        $region63: #{inversion_transformer_forward.1} parent=59 // pred_region
          %s505 = sand.u32 %s174, 1
          %s506 = scalar_lea.sflag [#allocation6], %s505
          %s507 = sand.u32 %s174, 1
          %s508 = smul.addr %s507, 8
          %s509 = scalar_lea.vmem [#allocation5], %s508
          %510 = dma.done %s506, 128
        $region64: #{inversion_transformer_forward.1} parent=59 // pred_fallthru
          _
        // Predicated region
        $region65: #{inversion_transformer_forward.1} parent=59 // pred_check
          %p511 = pneg %p215
        $region66: #{inversion_transformer_forward.1} parent=59 // pred_check_branch
          %513 = sbr.rel (%p511) target = $region68
        $region67: #{inversion_transformer_forward.1} parent=59 // pred_region
          %p514 = scmp.lt.s32.totalorder %s27, 1
          %s515 = scalar_select %p514, %s27, 1
          %s516 = smul.addr %s515, 8
          %s517 = scalar_lea.vmem %s6, %s516
        $region68: #{inversion_transformer_forward.1} parent=59 // pred_fallthru
          _
      $region60: #{inversion_transformer_forward.1} parent=5 // pred_fallthru
        _
    $region6: #{inversion_transformer_forward.1} parent=1 // loop_footer
      %s20 = sadd.s32 1, %s16
    $region7: #{inversion_transformer_forward.1} parent=1 // loop_footer_branch
      %15 = sbr.rel target = $region3
    $region8: #{inversion_transformer_forward.1} parent=1 // loop_exit
      _
    %518 = vsyncpa [#allocation6], 1
    %s519 = scalar_lea.sflag [#allocation6], 1
    %520 = vsyncpa %s519, 1

</llo_original>
